<compile_context>
chip_gen: v5e
topology: v5e:2x2
jax: 0.10.0
libtpu: 0.0.40
codegen_flags: <defaults>
</compile_context>

<pallas_src>
import jax
import jax.numpy as jnp
from jax import lax
from jax.experimental import pallas as pl
from jax.experimental.pallas import tpu as pltpu


def _vgg_block_kernel(x_ref, a1_ref, t1_ref, a2_ref, t2_ref, o_ref):
    """One image of the fused VGG block.

    x_ref  : (1, H, W*Cin)          bf16  lane-dense flattened NHWC image
    a1_ref : (3*W*Cin,  W*Cmid)     bf16  banded conv1 weights (BN1 folded)
    t1_ref : (1, W*Cmid)            f32   folded shift, tiled over W
    a2_ref : (3*W*Cmid, W*Cout)     bf16  banded conv2 weights (BN2 folded)
    t2_ref : (1, W*Cout)            f32   folded shift, tiled over W
    o_ref  : (1, H, W*Cout)         f32   lane-dense output
    """
    H = o_ref.shape[1]
    wcin = x_ref.shape[2]
    wcmid = t1_ref.shape[1]

    x = x_ref[0]                                          # (H, W*Cin)
    zx = jnp.zeros((1, wcin), x.dtype)
    xp = jnp.concatenate([zx, x, zx], axis=0)             # row zero-pad (H+2, .)

    # conv1 + BN1 + ReLU: 3-row im2col -> single MXU matmul (K = 3*W*Cin).
    p1 = jnp.concatenate([xp[dy:dy + H] for dy in range(3)], axis=-1)
    mid = jnp.dot(p1, a1_ref[...], preferred_element_type=jnp.float32)
    mid = jnp.maximum(mid + t1_ref[...], 0.0).astype(jnp.bfloat16)   # (H, W*Cmid)

    # conv2 + BN2 + ReLU: same structure on the intermediate.
    zm = jnp.zeros((1, wcmid), jnp.bfloat16)
    mp = jnp.concatenate([zm, mid, zm], axis=0)           # (H+2, W*Cmid)
    p2 = jnp.concatenate([mp[dy:dy + H] for dy in range(3)], axis=-1)
    y = jnp.dot(p2, a2_ref[...], preferred_element_type=jnp.float32)
    y = jnp.maximum(y + t2_ref[...], 0.0)

    o_ref[0] = y.astype(o_ref.dtype)                      # lane-dense store


def _fold_bn(w_oihw, b, g, beta, m, v, eps):
    """Fold eval-mode BN into conv: BN(conv(x,w)+b) = conv(x, w*s) + t."""
    s = g / jnp.sqrt(v + eps)
    w_hwio = jnp.transpose(w_oihw, (2, 3, 1, 0)) * s      # scale over Cout
    t = (b - m) * s + beta
    return w_hwio, t


def _banded_weights(w_hwio, W):
    """(3,3,Cin,Cout) HWIO conv weights -> (3*W*Cin, W*Cout) banded matmul weights.

    Row index  = dy*(W*Cin) + w_in*Cin + ci   (matches the 3-row im2col layout)
    Col index  = w_out*Cout + co              (matches the flattened output)
    Input column w_in feeds output column w_out through tap dx iff
    w_in == w_out + dx - 1 (out-of-range taps vanish == zero padding in W).
    """
    kh, kw, cin, cout = w_hwio.shape
    cols = jnp.arange(W)
    ind = (cols[:, None, None] ==
           cols[None, None, :] + jnp.arange(kw)[None, :, None] - 1)
    a = jnp.einsum('wxv,yxio->ywivo', ind.astype(w_hwio.dtype), w_hwio)
    return a.reshape(kh * W * cin, W * cout)


def vgg_block_nomax(x_nchw, params):
    """Fused VGG block (eval-mode BN). Input/output are NCHW float32."""
    w1, b1, g1, be1, m1, v1, w2, b2, g2, be2, m2, v2 = params
    eps = 1e-5

    N, Cin, H, W = x_nchw.shape
    Cmid = w1.shape[0]
    Cout = w2.shape[0]

    w1_hwio, t1 = _fold_bn(w1, b1, g1, be1, m1, v1, eps)
    w2_hwio, t2 = _fold_bn(w2, b2, g2, be2, m2, v2, eps)

    a1 = _banded_weights(w1_hwio, W).astype(jnp.bfloat16)   # (3*W*Cin,  W*Cmid)
    a2 = _banded_weights(w2_hwio, W).astype(jnp.bfloat16)   # (3*W*Cmid, W*Cout)
    t1v = jnp.tile(t1, W).reshape(1, W * Cmid).astype(jnp.float32)
    t2v = jnp.tile(t2, W).reshape(1, W * Cout).astype(jnp.float32)

    # NCHW -> lane-dense (N, H, W*Cin) bf16 (halves the input DMA bytes).
    x_flat = jnp.transpose(x_nchw, (0, 2, 3, 1)).reshape(N, H, W * Cin)
    x_flat = x_flat.astype(jnp.bfloat16)

    out_flat = pl.pallas_call(
        _vgg_block_kernel,
        out_shape=jax.ShapeDtypeStruct((N, H, W * Cout), jnp.float32),
        grid_spec=pltpu.PrefetchScalarGridSpec(
            num_scalar_prefetch=0,
            grid=(N,),
            in_specs=[
                pl.BlockSpec((1, H, W * Cin), lambda n: (n, 0, 0)),
                pl.BlockSpec((3 * W * Cin, W * Cmid), lambda n: (0, 0)),
                pl.BlockSpec((1, W * Cmid), lambda n: (0, 0)),
                pl.BlockSpec((3 * W * Cmid, W * Cout), lambda n: (0, 0)),
                pl.BlockSpec((1, W * Cout), lambda n: (0, 0)),
            ],
            out_specs=pl.BlockSpec((1, H, W * Cout), lambda n: (n, 0, 0)),
        ),
        compiler_params=pltpu.CompilerParams(
            dimension_semantics=("parallel",),
        ),
    )(x_flat, a1, t1v, a2, t2v)

    out_nhwc = out_flat.reshape(N, H, W, Cout)
    return jnp.transpose(out_nhwc, (0, 3, 1, 2))            # back to NCHW


def _reference(x_nchw, params):
    """Pure-JAX reference (same eval-mode BN semantics), f32 throughout."""
    w1, b1, g1, be1, m1, v1, w2, b2, g2, be2, m2, v2 = params
    eps = 1e-5

    def conv_bn_relu(x_nhwc, w_oihw, b, g, be, m, v):
        w_hwio = jnp.transpose(w_oihw, (2, 3, 1, 0))
        y = lax.conv_general_dilated(
            x_nhwc, w_hwio, window_strides=(1, 1), padding="SAME",
            dimension_numbers=("NHWC", "HWIO", "NHWC"))
        y = y + b
        y = (y - m) / jnp.sqrt(v + eps) * g + be
        return jnp.maximum(y, 0.0)

    x = jnp.transpose(x_nchw, (0, 2, 3, 1))
    x = conv_bn_relu(x, w1, b1, g1, be1, m1, v1)
    x = conv_bn_relu(x, w2, b2, g2, be2, m2, v2)
    return jnp.transpose(x, (0, 3, 1, 2))


def _init_params(key, in_channels, out_channels):
    ks = jax.random.split(key, 12)
    f = 1.0 / (in_channels * 9) ** 0.5
    f2 = 1.0 / (out_channels * 9) ** 0.5
    w1 = jax.random.uniform(ks[0], (out_channels, in_channels, 3, 3),
                            jnp.float32, -f, f)
    b1 = jax.random.uniform(ks[1], (out_channels,), jnp.float32, -f, f)
    g1 = jax.random.uniform(ks[2], (out_channels,), jnp.float32, 0.5, 1.5)
    be1 = 0.1 * jax.random.normal(ks[3], (out_channels,), jnp.float32)
    m1 = 0.1 * jax.random.normal(ks[4], (out_channels,), jnp.float32)
    v1 = jax.random.uniform(ks[5], (out_channels,), jnp.float32, 0.5, 1.5)
    w2 = jax.random.uniform(ks[6], (out_channels, out_channels, 3, 3),
                            jnp.float32, -f2, f2)
    b2 = jax.random.uniform(ks[7], (out_channels,), jnp.float32, -f2, f2)
    g2 = jax.random.uniform(ks[8], (out_channels,), jnp.float32, 0.5, 1.5)
    be2 = 0.1 * jax.random.normal(ks[9], (out_channels,), jnp.float32)
    m2 = 0.1 * jax.random.normal(ks[10], (out_channels,), jnp.float32)
    v2 = jax.random.uniform(ks[11], (out_channels,), jnp.float32, 0.5, 1.5)
    return (w1, b1, g1, be1, m1, v1, w2, b2, g2, be2, m2, v2)


if __name__ == "__main__":
    key = jax.random.PRNGKey(0)
    k_x, k_p = jax.random.split(key)

    N, Cin, Cout, H, W = 2, 4, 8, 16, 16
    x = jax.random.normal(k_x, (N, Cin, H, W), jnp.float32)
    params = _init_params(k_p, Cin, Cout)

    out = jax.block_until_ready(jax.jit(vgg_block_nomax)(x, params))
    ref = jax.block_until_ready(_reference(x, params))

    assert out.shape == (N, Cout, H, W), out.shape
    # bf16 matmul operands (f32 accumulation) -> loosened tolerance vs f32 ref.
    max_err = float(jnp.max(jnp.abs(out - ref)))
    assert jnp.allclose(out, ref, atol=5e-2, rtol=5e-2), max_err

    print("KERNEL_OK")
</pallas_src>

<mosaic_0001>
module attributes {stable_mosaic.version = 11 : i64} {
  func.func @_vgg_block_kernel(%arg0: i32, %arg1: memref<1x16x64xbf16, #tpu.memory_space<vmem>>, %arg2: memref<192x128xbf16, #tpu.memory_space<vmem>>, %arg3: memref<1x128xf32, #tpu.memory_space<vmem>>, %arg4: memref<384x128xbf16, #tpu.memory_space<vmem>>, %arg5: memref<1x128xf32, #tpu.memory_space<vmem>>, %arg6: memref<1x16x128xf32, #tpu.memory_space<vmem>>) attributes {dimension_semantics = [#tpu.dimension_semantics<parallel>], iteration_bounds = array<i64: 2>, scalar_prefetch = 0 : i64, scratch_operands = 0 : i64, tpu.core_type = #tpu.core_type<tc>, window_params = [{transform_indices = @transform_0, window_bounds = array<i64: 1, 16, 64>}, {pipeline_mode = #tpu.pipeline_mode<synchronous>, transform_indices = @transform_1, window_bounds = array<i64: 192, 128>}, {pipeline_mode = #tpu.pipeline_mode<synchronous>, transform_indices = @transform_2, window_bounds = array<i64: 1, 128>}, {pipeline_mode = #tpu.pipeline_mode<synchronous>, transform_indices = @transform_3, window_bounds = array<i64: 384, 128>}, {pipeline_mode = #tpu.pipeline_mode<synchronous>, transform_indices = @transform_4, window_bounds = array<i64: 1, 128>}, {transform_indices = @transform_5, window_bounds = array<i64: 1, 16, 128>}]} {
    %c0 = arith.constant 0 : index
    %c0_0 = arith.constant 0 : index
    %c0_1 = arith.constant 0 : index
    %0 = vector.load %arg1[%c0, %c0_0, %c0_1] : memref<1x16x64xbf16, #tpu.memory_space<vmem>>, vector<1x16x64xbf16>
    %1 = vector.shape_cast %0 : vector<1x16x64xbf16> to vector<16x64xbf16>
    %cst = arith.constant 0.000000e+00 : bf16
    %2 = vector.broadcast %cst : bf16 to vector<1x64xbf16>
    %3 = tpu.concatenate %2, %1, %2 in 0 : vector<1x64xbf16>, vector<16x64xbf16>, vector<1x64xbf16> -> vector<18x64xbf16>
    %4 = vector.extract_strided_slice %3 {offsets = [0, 0], sizes = [16, 64], strides = [1, 1]} : vector<18x64xbf16> to vector<16x64xbf16>
    %5 = vector.extract_strided_slice %3 {offsets = [1, 0], sizes = [16, 64], strides = [1, 1]} : vector<18x64xbf16> to vector<16x64xbf16>
    %6 = vector.extract_strided_slice %3 {offsets = [2, 0], sizes = [16, 64], strides = [1, 1]} : vector<18x64xbf16> to vector<16x64xbf16>
    %7 = tpu.concatenate %4, %5, %6 in 1 : vector<16x64xbf16>, vector<16x64xbf16>, vector<16x64xbf16> -> vector<16x192xbf16>
    %c0_2 = arith.constant 0 : index
    %c0_3 = arith.constant 0 : index
    %8 = vector.load %arg2[%c0_2, %c0_3] : memref<192x128xbf16, #tpu.memory_space<vmem>>, vector<192x128xbf16>
    %cst_4 = arith.constant dense<0.000000e+00> : vector<16x128xf32>
    %9 = tpu.matmul %7, %8, %cst_4 {dimension_numbers = #tpu.dot_dimension_numbers<[1], [0], [0], [1], [0, 0, 1, 1], [], []>} : vector<16x192xbf16>, vector<192x128xbf16>, vector<16x128xf32> -> vector<16x128xf32>
    %c0_5 = arith.constant 0 : index
    %c0_6 = arith.constant 0 : index
    %10 = vector.load %arg3[%c0_5, %c0_6] : memref<1x128xf32, #tpu.memory_space<vmem>>, vector<1x128xf32>
    %11 = vector.broadcast %10 : vector<1x128xf32> to vector<16x128xf32>
    %12 = arith.addf %9, %11 : vector<16x128xf32>
    %cst_7 = arith.constant 0.000000e+00 : f32
    %13 = vector.broadcast %cst_7 : f32 to vector<16x128xf32>
    %14 = arith.maximumf %12, %13 : vector<16x128xf32>
    %15 = arith.truncf %14 : vector<16x128xf32> to vector<16x128xbf16>
    %cst_8 = arith.constant 0.000000e+00 : bf16
    %16 = vector.broadcast %cst_8 : bf16 to vector<1x128xbf16>
    %17 = tpu.concatenate %16, %15, %16 in 0 : vector<1x128xbf16>, vector<16x128xbf16>, vector<1x128xbf16> -> vector<18x128xbf16>
    %18 = vector.extract_strided_slice %17 {offsets = [0, 0], sizes = [16, 128], strides = [1, 1]} : vector<18x128xbf16> to vector<16x128xbf16>
    %19 = vector.extract_strided_slice %17 {offsets = [1, 0], sizes = [16, 128], strides = [1, 1]} : vector<18x128xbf16> to vector<16x128xbf16>
    %20 = vector.extract_strided_slice %17 {offsets = [2, 0], sizes = [16, 128], strides = [1, 1]} : vector<18x128xbf16> to vector<16x128xbf16>
    %21 = tpu.concatenate %18, %19, %20 in 1 : vector<16x128xbf16>, vector<16x128xbf16>, vector<16x128xbf16> -> vector<16x384xbf16>
    %c0_9 = arith.constant 0 : index
    %c0_10 = arith.constant 0 : index
    %22 = vector.load %arg4[%c0_9, %c0_10] : memref<384x128xbf16, #tpu.memory_space<vmem>>, vector<384x128xbf16>
    %cst_11 = arith.constant dense<0.000000e+00> : vector<16x128xf32>
    %23 = tpu.matmul %21, %22, %cst_11 {dimension_numbers = #tpu.dot_dimension_numbers<[1], [0], [0], [1], [0, 0, 1, 1], [], []>} : vector<16x384xbf16>, vector<384x128xbf16>, vector<16x128xf32> -> vector<16x128xf32>
    %c0_12 = arith.constant 0 : index
    %c0_13 = arith.constant 0 : index
    %24 = vector.load %arg5[%c0_12, %c0_13] : memref<1x128xf32, #tpu.memory_space<vmem>>, vector<1x128xf32>
    %25 = vector.broadcast %24 : vector<1x128xf32> to vector<16x128xf32>
    %26 = arith.addf %23, %25 : vector<16x128xf32>
    %cst_14 = arith.constant 0.000000e+00 : f32
    %27 = vector.broadcast %cst_14 : f32 to vector<16x128xf32>
    %28 = arith.maximumf %26, %27 : vector<16x128xf32>
    %c0_15 = arith.constant 0 : index
    %c0_16 = arith.constant 0 : index
    %c0_17 = arith.constant 0 : index
    %29 = vector.load %arg6[%c0_15, %c0_16, %c0_17] : memref<1x16x128xf32, #tpu.memory_space<vmem>>, vector<1x16x128xf32>
    %30 = vector.shape_cast %29 : vector<1x16x128xf32> to vector<16x128xf32>
    %31 = vector.shape_cast %28 : vector<16x128xf32> to vector<1x16x128xf32>
    tpu.vector_store %arg6[%c0_15, %c0_16, %c0_17], %31 {strides = array<i32>} : memref<1x16x128xf32, #tpu.memory_space<vmem>>, vector<1x16x128xf32>,
    return
  }
  func.func @transform_0(%arg0: i32) -> (i32, i32, i32) {
    %c0_i32 = arith.constant 0 : i32
    %c0_i32_0 = arith.constant 0 : i32
    %c0_i32_1 = arith.constant 0 : i32
    return %arg0, %c0_i32, %c0_i32_0 : i32, i32, i32
  }
  func.func @transform_1(%arg0: i32) -> (i32, i32) {
    %c0_i32 = arith.constant 0 : i32
    %c0_i32_0 = arith.constant 0 : i32
    %c0_i32_1 = arith.constant 0 : i32
    return %c0_i32, %c0_i32_0 : i32, i32
  }
  func.func @transform_2(%arg0: i32) -> (i32, i32) {
    %c0_i32 = arith.constant 0 : i32
    %c0_i32_0 = arith.constant 0 : i32
    %c0_i32_1 = arith.constant 0 : i32
    return %c0_i32, %c0_i32_0 : i32, i32
  }
  func.func @transform_3(%arg0: i32) -> (i32, i32) {
    %c0_i32 = arith.constant 0 : i32
    %c0_i32_0 = arith.constant 0 : i32
    %c0_i32_1 = arith.constant 0 : i32
    return %c0_i32, %c0_i32_0 : i32, i32
  }
  func.func @transform_4(%arg0: i32) -> (i32, i32) {
    %c0_i32 = arith.constant 0 : i32
    %c0_i32_0 = arith.constant 0 : i32
    %c0_i32_1 = arith.constant 0 : i32
    return %c0_i32, %c0_i32_0 : i32, i32
  }
  func.func @transform_5(%arg0: i32) -> (i32, i32, i32) {
    %c0_i32 = arith.constant 0 : i32
    %c0_i32_0 = arith.constant 0 : i32
    %c0_i32_1 = arith.constant 0 : i32
    return %arg0, %c0_i32, %c0_i32_0 : i32, i32, i32
  }
}

</mosaic_0001>

<llo_original>
// kernel: tile.13
$region0: #{tile.13}
  #allocation0 [shape = 's32[1]{0}', space=sflag, size = 0x4, scoped, tag = 'scoped memory for tile.13']
  %s0 = inlined_call_operand.vmem [shape: f32[8], index: 0, kind: input, shape index: {}]
  %s1 = inlined_call_operand.vmem [shape: f32[16,8], index: 1, kind: output, shape index: {}]
  // Predicated region
  $region2: #{tile.13} parent=0 // pred_check
    _
  $region3: #{tile.13} parent=0 // pred_check_branch
    %3 = sbr.rel (0) target = $region5
  $region4: #{tile.13} parent=0 // pred_region
    _
  $region5: #{tile.13} parent=0 // pred_fallthru
    _
  %v4 = vld [vmem:[%s0] ss:$0 sm:$0xff]
  %5 = vst [vmem:[%s1] sm:$0xff] %v4
  %s6 = scalar_lea.vmem %s1, 8
  %7 = vst [vmem:[%s6] sm:$0xff] %v4

// kernel: tile.14
$region0: #{tile.14}
  %s0 = inlined_call_operand.vmem [shape: f32[16,8], index: 0, kind: input, shape index: {}]
  %s1 = inlined_call_operand.vmem [shape: f32[1,128], index: 1, kind: output, shape index: {}]
  $region1: #{tile.14} parent=0
    #allocation0 [shape = 'u8[4096]{0}', space=vmem, size = 0x1000, scoped, tag = 'scoped mem for output reshape']
    %v2 = vld [vmem:[%s0] sm:$0x1]
    %vm3 = vcmask 64512
    %4 = vst.msk [vmem:[#allocation0] sm:$0x1] %vm3, %v2
    %s5 = scalar_lea.vmem %s0, 15
    %v6 = vld [vmem:[%s5] sm:$0x1]
    %7 = vrot.lane.b32.xlu0 %v6, 120
    %v8 = vpop.permute.xlu0 %7
    %vm9 = vcmask 1048512
    %10 = vst.msk [vmem:[#allocation0] sm:$0x1] %vm9, %v8
    %s11 = scalar_lea.vmem %s0, 14
    %v12 = vld [vmem:[%s11] sm:$0x1]
    %13 = vrot.lane.b32.xlu0 %v12, 112
    %v14 = vpop.permute.xlu0 %13
    %vm15 = vcmask 982912
    %16 = vst.msk [vmem:[#allocation0] sm:$0x1] %vm15, %v14
    %s17 = scalar_lea.vmem %s0, 13
    %v18 = vld [vmem:[%s17] sm:$0x1]
    %19 = vrot.lane.b32.xlu0 %v18, 104
    %v20 = vpop.permute.xlu0 %19
    %vm21 = vcmask 917312
    %22 = vst.msk [vmem:[#allocation0] sm:$0x1] %vm21, %v20
    %s23 = scalar_lea.vmem %s0, 12
    %v24 = vld [vmem:[%s23] sm:$0x1]
    %25 = vrot.lane.b32.xlu0 %v24, 96
    %v26 = vpop.permute.xlu0 %25
    %vm27 = vcmask 851712
    %28 = vst.msk [vmem:[#allocation0] sm:$0x1] %vm27, %v26
    %s29 = scalar_lea.vmem %s0, 11
    %v30 = vld [vmem:[%s29] sm:$0x1]
    %31 = vrot.lane.b32.xlu0 %v30, 88
    %v32 = vpop.permute.xlu0 %31
    %vm33 = vcmask 786112
    %34 = vst.msk [vmem:[#allocation0] sm:$0x1] %vm33, %v32
    %s35 = scalar_lea.vmem %s0, 10
    %v36 = vld [vmem:[%s35] sm:$0x1]
    %37 = vrot.lane.b32.xlu0 %v36, 80
    %v38 = vpop.permute.xlu0 %37
    %vm39 = vcmask 720512
    %40 = vst.msk [vmem:[#allocation0] sm:$0x1] %vm39, %v38
    %s41 = scalar_lea.vmem %s0, 9
    %v42 = vld [vmem:[%s41] sm:$0x1]
    %43 = vrot.lane.b32.xlu0 %v42, 72
    %v44 = vpop.permute.xlu0 %43
    %vm45 = vcmask 654912
    %46 = vst.msk [vmem:[#allocation0] sm:$0x1] %vm45, %v44
    %s47 = scalar_lea.vmem %s0, 8
    %v48 = vld [vmem:[%s47] sm:$0x1]
    %49 = vrot.lane.b32.xlu0 %v48, 64
    %v50 = vpop.permute.xlu0 %49
    %vm51 = vcmask 589312
    %52 = vst.msk [vmem:[#allocation0] sm:$0x1] %vm51, %v50
    %s53 = scalar_lea.vmem %s0, 7
    %v54 = vld [vmem:[%s53] sm:$0x1]
    %55 = vrot.lane.b32.xlu0 %v54, 56
    %v56 = vpop.permute.xlu0 %55
    %vm57 = vcmask 523712
    %58 = vst.msk [vmem:[#allocation0] sm:$0x1] %vm57, %v56
    %s59 = scalar_lea.vmem %s0, 6
    %v60 = vld [vmem:[%s59] sm:$0x1]
    %61 = vrot.lane.b32.xlu0 %v60, 48
    %v62 = vpop.permute.xlu0 %61
    %vm63 = vcmask 458112
    %64 = vst.msk [vmem:[#allocation0] sm:$0x1] %vm63, %v62
    %s65 = scalar_lea.vmem %s0, 5
    %v66 = vld [vmem:[%s65] sm:$0x1]
    %67 = vrot.lane.b32.xlu0 %v66, 40
    %v68 = vpop.permute.xlu0 %67
    %vm69 = vcmask 392512
    %70 = vst.msk [vmem:[#allocation0] sm:$0x1] %vm69, %v68
    %s71 = scalar_lea.vmem %s0, 4
    %v72 = vld [vmem:[%s71] sm:$0x1]
    %73 = vrot.lane.b32.xlu0 %v72, 32
    %v74 = vpop.permute.xlu0 %73
    %vm75 = vcmask 326912
    %76 = vst.msk [vmem:[#allocation0] sm:$0x1] %vm75, %v74
    %s77 = scalar_lea.vmem %s0, 3
    %v78 = vld [vmem:[%s77] sm:$0x1]
    %79 = vrot.lane.b32.xlu0 %v78, 24
    %v80 = vpop.permute.xlu0 %79
    %vm81 = vcmask 261312
    %82 = vst.msk [vmem:[#allocation0] sm:$0x1] %vm81, %v80
    %s83 = scalar_lea.vmem %s0, 2
    %v84 = vld [vmem:[%s83] sm:$0x1]
    %85 = vrot.lane.b32.xlu0 %v84, 16
    %v86 = vpop.permute.xlu0 %85
    %vm87 = vcmask 195712
    %88 = vst.msk [vmem:[#allocation0] sm:$0x1] %vm87, %v86
    %s89 = scalar_lea.vmem %s0, 1
    %v90 = vld [vmem:[%s89] sm:$0x1]
    %91 = vrot.lane.b32.xlu0 %v90, 8
    %v92 = vpop.permute.xlu0 %91
    %vm93 = vcmask 130112
    %94 = vst.msk [vmem:[#allocation0] sm:$0x1] %vm93, %v92
    %s96 = ssub.s32 2, 1
    %v97 = vld [vmem:[#allocation0] sm:%s96]
    %s99 = ssub.s32 2, 1
    %100 = vst [vmem:[%s1] sm:%s99] %v97

// kernel: vgg_block_nomax.1
$region0: #{vgg_block_nomax.1}
  #allocation0 [shape = 'u32[]', space=smem, size = 0x4, offset = 0x4, fixed_abs, tag = 'smem constant byte address 0x4 - core index']
  #allocation1 [shape = 'u32[72,128]{1,0:T(1,128)}', space=vmem, size = 0x9000, scoped, tag = 'internal scratch']
  %s0 = inlined_call_operand.vmem [shape: bf16[2,16,64], index: 0, kind: input, shape index: {}]
  %s1 = inlined_call_operand.vmem [shape: bf16[192,128], index: 1, kind: input, shape index: {}]
  %s2 = inlined_call_operand.vmem [shape: f32[1,128], index: 2, kind: input, shape index: {}]
  %s3 = inlined_call_operand.vmem [shape: bf16[384,128], index: 3, kind: input, shape index: {}]
  %s4 = inlined_call_operand.vmem [shape: f32[1,128], index: 4, kind: input, shape index: {}]
  %s5 = inlined_call_operand.vmem [shape: f32[2,16,128], index: 5, kind: output, shape index: {}]
  %s6 = sld [smem:[#allocation0]]
  $region53: #{vgg_block_nomax.1} parent=0
    _
  %s8 = ssub.s32 1, %s6
  %s9 = scalar_select 0, %s8, %s6
  loop: start=0, step=1, limit=4
  $region2: #{vgg_block_nomax.1} parent=0 // loop_pre_header
    _
  $region3: #{vgg_block_nomax.1} parent=0 // loop_header
    %s11 = sphi 0, %s15
    %p12 = scmp.ge.s32.totalorder %s11, 4
    %s21 = sphi 0, %s23
    %s24 = sphi 0, %s21
    %s25 = sphi 0, %s24
    %s41 = sphi 0, %s25
    %s45 = sphi 0, %s45
    %s47 = sphi 0, %s45
    %s48 = sphi 0, %s47
    %s62 = sphi 0, %s48
    %s66 = sphi 0, %s66
    %s68 = sphi 0, %s66
    %s69 = sphi 0, %s68
    %s83 = sphi 0, %s69
    %s87 = sphi 0, %s87
    %s89 = sphi 0, %s87
    %s90 = sphi 0, %s89
    %s104 = sphi 0, %s90
    %s108 = sphi 0, %s108
    %s110 = sphi 0, %s108
    %s111 = sphi 0, %s110
    %s125 = sphi 0, %s111
    %s131 = sphi 0, %s133
    %s134 = sphi 0, %s131
    %s135 = sphi 0, %s134
    %s151 = sphi 0, %s135
  $region4: #{vgg_block_nomax.1} parent=0 // loop_header_branch
    %14 = sbr.rel (%p12) target = $region8
  $region5: #{vgg_block_nomax.1} parent=0 // loop_body
    %s16 = ssub.s32 %s11, 1
    %s17 = ssub.s32 %s11, 2
    %s18 = sadd.s32 %s11, 1
    %s19 = ssub.s32 %s11, %s18
    %p20 = scmp.eq.s32.totalorder %s19, 0
    %s22 = sadd.s32 %s21, 1
    %s23 = scalar_select %p20, %s21, %s22
    %p26 = pneg %p20
    %p27 = scmp.eq.s32.totalorder %s11, 1
    %p28 = por %p26, %p27
    %p29 = scmp.ne.s32.totalorder %s21, %s24
    %p30 = scmp.eq.s32.totalorder %s11, 0
    %p31 = por %p29, %p30
    %p32 = scmp.ne.s32.totalorder %s21, %s24
    %p33 = scmp.eq.s32.totalorder %s16, 1
    %p34 = por %p32, %p33
    %p35 = scmp.ne.s32.totalorder %s24, %s25
    %p36 = scmp.eq.s32.totalorder %s16, 0
    %p37 = por %p35, %p36
    %p38 = scmp.ne.s32.totalorder %s24, %s25
    %p39 = scmp.eq.s32.totalorder %s17, 1
    %p40 = por %p38, %p39
    %p42 = scmp.ne.s32.totalorder %s25, %s41
    %p43 = scmp.eq.s32.totalorder %s17, 0
    %p44 = por %p42, %p43
    %s46 = sadd.s32 %s45, 1
    %p49 = scmp.eq.s32.totalorder %s11, 1
    %p50 = scmp.ne.s32.totalorder %s45, %s47
    %p51 = scmp.eq.s32.totalorder %s11, 0
    %p52 = por %p50, %p51
    %p53 = scmp.ne.s32.totalorder %s45, %s47
    %p54 = scmp.eq.s32.totalorder %s16, 1
    %p55 = por %p53, %p54
    %p56 = scmp.ne.s32.totalorder %s47, %s48
    %p57 = scmp.eq.s32.totalorder %s16, 0
    %p58 = por %p56, %p57
    %p59 = scmp.ne.s32.totalorder %s47, %s48
    %p60 = scmp.eq.s32.totalorder %s17, 1
    %p61 = por %p59, %p60
    %p63 = scmp.ne.s32.totalorder %s48, %s62
    %p64 = scmp.eq.s32.totalorder %s17, 0
    %p65 = por %p63, %p64
    %s67 = sadd.s32 %s66, 1
    %p70 = scmp.eq.s32.totalorder %s11, 1
    %p71 = scmp.ne.s32.totalorder %s66, %s68
    %p72 = scmp.eq.s32.totalorder %s11, 0
    %p73 = por %p71, %p72
    %p74 = scmp.ne.s32.totalorder %s66, %s68
    %p75 = scmp.eq.s32.totalorder %s16, 1
    %p76 = por %p74, %p75
    %p77 = scmp.ne.s32.totalorder %s68, %s69
    %p78 = scmp.eq.s32.totalorder %s16, 0
    %p79 = por %p77, %p78
    %p80 = scmp.ne.s32.totalorder %s68, %s69
    %p81 = scmp.eq.s32.totalorder %s17, 1
    %p82 = por %p80, %p81
    %p84 = scmp.ne.s32.totalorder %s69, %s83
    %p85 = scmp.eq.s32.totalorder %s17, 0
    %p86 = por %p84, %p85
    %s88 = sadd.s32 %s87, 1
    %p91 = scmp.eq.s32.totalorder %s11, 1
    %p92 = scmp.ne.s32.totalorder %s87, %s89
    %p93 = scmp.eq.s32.totalorder %s11, 0
    %p94 = por %p92, %p93
    %p95 = scmp.ne.s32.totalorder %s87, %s89
    %p96 = scmp.eq.s32.totalorder %s16, 1
    %p97 = por %p95, %p96
    %p98 = scmp.ne.s32.totalorder %s89, %s90
    %p99 = scmp.eq.s32.totalorder %s16, 0
    %p100 = por %p98, %p99
    %p101 = scmp.ne.s32.totalorder %s89, %s90
    %p102 = scmp.eq.s32.totalorder %s17, 1
    %p103 = por %p101, %p102
    %p105 = scmp.ne.s32.totalorder %s90, %s104
    %p106 = scmp.eq.s32.totalorder %s17, 0
    %p107 = por %p105, %p106
    %s109 = sadd.s32 %s108, 1
    %p112 = scmp.eq.s32.totalorder %s11, 1
    %p113 = scmp.ne.s32.totalorder %s108, %s110
    %p114 = scmp.eq.s32.totalorder %s11, 0
    %p115 = por %p113, %p114
    %p116 = scmp.ne.s32.totalorder %s108, %s110
    %p117 = scmp.eq.s32.totalorder %s16, 1
    %p118 = por %p116, %p117
    %p119 = scmp.ne.s32.totalorder %s110, %s111
    %p120 = scmp.eq.s32.totalorder %s16, 0
    %p121 = por %p119, %p120
    %p122 = scmp.ne.s32.totalorder %s110, %s111
    %p123 = scmp.eq.s32.totalorder %s17, 1
    %p124 = por %p122, %p123
    %p126 = scmp.ne.s32.totalorder %s111, %s125
    %p127 = scmp.eq.s32.totalorder %s17, 0
    %p128 = por %p126, %p127
    %s129 = ssub.s32 %s11, %s18
    %p130 = scmp.eq.s32.totalorder %s129, 0
    %s132 = sadd.s32 %s131, 1
    %s133 = scalar_select %p130, %s131, %s132
    %p136 = pneg %p130
    %p137 = scmp.eq.s32.totalorder %s11, 1
    %p138 = por %p136, %p137
    %p139 = scmp.ne.s32.totalorder %s131, %s134
    %p140 = scmp.eq.s32.totalorder %s11, 0
    %p141 = por %p139, %p140
    %p142 = scmp.ne.s32.totalorder %s131, %s134
    %p143 = scmp.eq.s32.totalorder %s16, 1
    %p144 = por %p142, %p143
    %p145 = scmp.ne.s32.totalorder %s134, %s135
    %p146 = scmp.eq.s32.totalorder %s16, 0
    %p147 = por %p145, %p146
    %p148 = scmp.ne.s32.totalorder %s134, %s135
    %p149 = scmp.eq.s32.totalorder %s17, 1
    %p150 = por %p148, %p149
    %p152 = scmp.ne.s32.totalorder %s135, %s151
    %p153 = scmp.eq.s32.totalorder %s17, 0
    %p154 = por %p152, %p153
    %p155 = scmp.le.s32.totalorder 1, %s11
    %p156 = scmp.lt.s32.totalorder %s11, 3
    %p157 = pnand %p155, %p156
    %p158 = pneg %p157
    // Predicated region
    $region9: #{vgg_block_nomax.1} parent=5 // pred_check
      _
    $region10: #{vgg_block_nomax.1} parent=5 // pred_check_branch
      %160 = sbr.rel (%p157) target = $region12
    $region11: #{vgg_block_nomax.1} parent=5 // pred_region
      %s161 = ssub.s32 %s11, 1
      // Predicated region
      $region13: #{vgg_block_nomax.1} parent=11 // pred_check
        %p162 = pneg %p58
      $region14: #{vgg_block_nomax.1} parent=11 // pred_check_branch
        %164 = sbr.rel (%p162) target = $region16
      $region15: #{vgg_block_nomax.1} parent=11 // pred_region
        _
      $region16: #{vgg_block_nomax.1} parent=11 // pred_fallthru
        _
      // Predicated region
      $region17: #{vgg_block_nomax.1} parent=11 // pred_check
        %p165 = pneg %p79
      $region18: #{vgg_block_nomax.1} parent=11 // pred_check_branch
        %167 = sbr.rel (%p165) target = $region20
      $region19: #{vgg_block_nomax.1} parent=11 // pred_region
        _
      $region20: #{vgg_block_nomax.1} parent=11 // pred_fallthru
        _
      // Predicated region
      $region21: #{vgg_block_nomax.1} parent=11 // pred_check
        %p168 = pneg %p100
      $region22: #{vgg_block_nomax.1} parent=11 // pred_check_branch
        %170 = sbr.rel (%p168) target = $region24
      $region23: #{vgg_block_nomax.1} parent=11 // pred_region
        _
      $region24: #{vgg_block_nomax.1} parent=11 // pred_fallthru
        _
      // Predicated region
      $region25: #{vgg_block_nomax.1} parent=11 // pred_check
        %p171 = pneg %p121
      $region26: #{vgg_block_nomax.1} parent=11 // pred_check_branch
        %173 = sbr.rel (%p171) target = $region28
      $region27: #{vgg_block_nomax.1} parent=11 // pred_region
        _
      $region28: #{vgg_block_nomax.1} parent=11 // pred_fallthru
        _
    $region12: #{vgg_block_nomax.1} parent=5 // pred_fallthru
      _
    %p174 = scmp.lt.s32.totalorder %s11, 2
    // Predicated region
    $region29: #{vgg_block_nomax.1} parent=5 // pred_check
      %p175 = pneg %p174
    $region30: #{vgg_block_nomax.1} parent=5 // pred_check_branch
      %177 = sbr.rel (%p175) target = $region32
    $region31: #{vgg_block_nomax.1} parent=5 // pred_region
      // Predicated region
      $region33: #{vgg_block_nomax.1} parent=31 // pred_check
        %p178 = pneg %p31
      $region34: #{vgg_block_nomax.1} parent=31 // pred_check_branch
        %180 = sbr.rel (%p178) target = $region36
      $region35: #{vgg_block_nomax.1} parent=31 // pred_region
        %p181 = scmp.lt.s32.totalorder %s11, 1
        %s182 = scalar_select %p181, %s11, 1
        %s183 = smul.addr %s182, 2
        %s184 = smul.addr %s183, 4
        %s185 = scalar_lea.vmem %s0, %s184
      $region36: #{vgg_block_nomax.1} parent=31 // pred_fallthru
        _
    $region32: #{vgg_block_nomax.1} parent=5 // pred_fallthru
      _
    %p186 = scmp.le.s32.totalorder 1, %s11
    %p187 = scmp.lt.s32.totalorder %s11, 3
    %p188 = pnand %p186, %p187
    %p189 = pneg %p188
    // Predicated region
    $region37: #{vgg_block_nomax.1} parent=5 // pred_check
      _
    $region38: #{vgg_block_nomax.1} parent=5 // pred_check_branch
      %191 = sbr.rel (%p188) target = $region40
    $region39: #{vgg_block_nomax.1} parent=5 // pred_region
      %s192 = ssub.s32 %s11, 1
      %p193 = scmp.lt.s32.totalorder %s16, 1
      %s194 = scalar_select %p193, %s16, 1
      %s195 = smul.addr %s194, 2
      %s196 = smul.addr %s195, 4
      %s197 = scalar_lea.vmem %s0, %s196
      %p198 = pneg %p37
      %p199 = pneg %p34
      %p200 = pneg %p58
      %p201 = pneg %p55
      %p202 = pneg %p79
      %p203 = pneg %p76
      %p204 = pneg %p100
      %p205 = pneg %p97
      %p206 = pneg %p121
      %p207 = pneg %p118
      %p208 = pneg %p147
      %p209 = pneg %p144
      %p210 = scmp.lt.s32.totalorder %s16, 1
      %s211 = scalar_select %p210, %s16, 1
      %s212 = smul.addr %s211, 2
      %s213 = smul.addr %s212, 8
      %s214 = scalar_lea.vmem %s5, %s213
      %p215 = scmp.lt.s32.totalorder %s16, 1
      %s216 = scalar_select %p215, %s16, 1
      %s217 = smul.addr %s216, 2
      %s218 = smul.addr %s217, 4
      %s219 = scalar_lea.vmem %s0, %s218
      %p220 = scmp.lt.s32.totalorder %s16, 1
      %s221 = scalar_select %p220, %s16, 1
      %s222 = smul.addr %s221, 2
      %s223 = smul.addr %s222, 8
      %s224 = scalar_lea.vmem %s5, %s223
      %v226 = vld [vmem:[%s219] sm:$0xf]
      %v227 = vld [vmem:[%s219 + $0x4] sm:$0xf]
      %v230 = vunpack.c.l.b16 %v226
      %v231 = vunpack.c.l.b16 %v227
      %v232 = vpack.c.b16 %v231, %v230
      %v234 = vshrl.u32 %v232, 16
      %v236 = vrot.slane %v234, 7
      %v237 = vshll.u32 %v232, 16
      %v239 = vor.u32 %v236, %v237
      %vm242 = vcmask 1040384
      %vm243 = vsmask.f32 256
      %vm244 = vmand %vm242, %vm243
      %v245 = vsel %vm244, 0, %v239
      %v246 = vsel %vm244, %v236, 0
      %vm247 = vsmask.f32 7424
      %v249 = vshrl.u32 %v245, 16
      %v251 = vshll.u32 %v245, 16
      %v253 = vrot.slane %v251, 1
      %v254 = vor.u32 %v249, %v253
      %v256 = vshll.u32 %v246, 16
      %v258 = vrot.slane %v256, 1
      %v259 = vsel %vm247, %v254, %v258
      %260 = vrot.lane.b32.xlu0 %v259, 64
      %v261 = vpop.permute.xlu0 %260
      %vm264 = vcmask 1046528
      %v265 = vrot.slane %v245, 1
      %v266 = vrot.slane %v246, 1
      %v267 = vsel %vm264, %v265, %v266
      %vm268 = vcmask 523264
      %v270 = vsel %vm268, %v245, %v261
      %v272 = vld [vmem:[%s1] sm:$0xf]
      %v273 = vld [vmem:[%s1 + $0x4] sm:$0xf]
      %v274 = vld [vmem:[%s1 + $0x8] sm:$0xf]
      %v275 = vld [vmem:[%s1 + $0xc] sm:$0xf]
      %v276 = vld [vmem:[%s1 + $0x10] sm:$0xf]
      %v277 = vld [vmem:[%s1 + $0x14] sm:$0xf]
      %v278 = vld [vmem:[%s1 + $0x18] sm:$0xf]
      %v279 = vld [vmem:[%s1 + $0x1c] sm:$0xf]
      %v280 = vld [vmem:[%s1 + $0x20] sm:$0xf]
      %v281 = vld [vmem:[%s1 + $0x24] sm:$0xf]
      %v282 = vld [vmem:[%s1 + $0x28] sm:$0xf]
      %v283 = vld [vmem:[%s1 + $0x2c] sm:$0xf]
      %v284 = vld [vmem:[%s1 + $0x30] sm:$0xf]
      %v285 = vld [vmem:[%s1 + $0x34] sm:$0xf]
      %v286 = vld [vmem:[%s1 + $0x38] sm:$0xf]
      %v287 = vld [vmem:[%s1 + $0x3c] sm:$0xf]
      %v288 = vld [vmem:[%s1 + $0x40] sm:$0xf]
      %v289 = vld [vmem:[%s1 + $0x44] sm:$0xf]
      %v290 = vld [vmem:[%s1 + $0x48] sm:$0xf]
      %v291 = vld [vmem:[%s1 + $0x4c] sm:$0xf]
      %v292 = vld [vmem:[%s1 + $0x50] sm:$0xf]
      %v293 = vld [vmem:[%s1 + $0x54] sm:$0xf]
      %v294 = vld [vmem:[%s1 + $0x58] sm:$0xf]
      %v295 = vld [vmem:[%s1 + $0x5c] sm:$0xf]
      %v296 = vld [vmem:[%s2] sm:$0x1]
      %v298 = vperm.slane %v296, 0
      %v324 = vunpack.c.l.b16 %v272
      %v325 = vunpack.c.l.b16 %v273
      %v326 = vunpack.c.l.b16 %v274
      %v327 = vunpack.c.l.b16 %v275
      %v328 = vunpack.c.l.b16 %v276
      %v329 = vunpack.c.l.b16 %v277
      %v330 = vunpack.c.l.b16 %v278
      %v331 = vunpack.c.l.b16 %v279
      %v332 = vunpack.c.l.b16 %v280
      %v333 = vunpack.c.l.b16 %v281
      %v334 = vunpack.c.l.b16 %v282
      %v335 = vunpack.c.l.b16 %v283
      %v336 = vunpack.c.l.b16 %v284
      %v337 = vunpack.c.l.b16 %v285
      %v338 = vunpack.c.l.b16 %v286
      %v339 = vunpack.c.l.b16 %v287
      %v340 = vunpack.c.l.b16 %v288
      %v341 = vunpack.c.l.b16 %v289
      %v342 = vunpack.c.l.b16 %v290
      %v343 = vunpack.c.l.b16 %v291
      %v344 = vunpack.c.l.b16 %v292
      %v345 = vunpack.c.l.b16 %v293
      %v346 = vunpack.c.l.b16 %v294
      %v347 = vunpack.c.l.b16 %v295
      %v348 = vpack.c.b16 %v325, %v324
      %v349 = vpack.c.b16 %v327, %v326
      %v350 = vpack.c.b16 %v329, %v328
      %v351 = vpack.c.b16 %v331, %v330
      %v352 = vpack.c.b16 %v333, %v332
      %v353 = vpack.c.b16 %v335, %v334
      %v354 = vpack.c.b16 %v337, %v336
      %v355 = vpack.c.b16 %v339, %v338
      %v356 = vpack.c.b16 %v341, %v340
      %v357 = vpack.c.b16 %v343, %v342
      %v358 = vpack.c.b16 %v345, %v344
      %v359 = vpack.c.b16 %v347, %v346
      %v373 = vsel %vm268, %v267, 0
      %375 = vmatpush.bf16.msra.mxu0 %v355
      %376 = vmatpush.bf16.msra.mxu0 %v354
      %377 = vmatpush.bf16.msra.mxu0 %v353
      %378 = vmatpush.bf16.msra.mxu0 %v352
      %379 = vmatpush.bf16.msra.mxu0 %v351
      %380 = vmatpush.bf16.msra.mxu0 %v350
      %381 = vmatpush.bf16.msra.mxu0 %v349
      %382 = vmatpush.bf16.msra.mxu0 %v348
      %383 = vmatmul.bf16.gmra.mxu0 %v270
      %v384 = vpop.f32.mrf.mxu0
      %v385 = vadd.f32 %v298, %v384
      %v386 = vpop.f32.mrf.mxu0
      %v387 = vadd.f32 %v298, %v386
      %388 = vdwg.mxu0
      %389 = vmatpush.bf16.msra.mxu0 0
      %390 = vmatpush.bf16.msra.mxu0 0
      %391 = vmatpush.bf16.msra.mxu0 0
      %392 = vmatpush.bf16.msra.mxu0 0
      %393 = vmatpush.bf16.msra.mxu0 %v359
      %394 = vmatpush.bf16.msra.mxu0 %v358
      %395 = vmatpush.bf16.msra.mxu0 %v357
      %396 = vmatpush.bf16.msra.mxu0 %v356
      %397 = vmatmul.bf16.gmra.mxu0 %v373
      %v398 = vpop.f32.mrf.mxu0
      %v399 = vadd.f32 %v385, %v398
      %v400 = vpop.f32.mrf.mxu0
      %v401 = vadd.f32 %v387, %v400
      %402 = vdwg.mxu0
      %v403 = vmax.f32 %v399, 0.0
      %v404 = vmax.f32 %v401, 0.0
      %v405 = vpack.c.bf16 %v403, %v403
      %v406 = vpack.c.bf16 %v404, %v404
      %v409 = vunpack.c.l.b16 %v405
      %v410 = vunpack.c.l.b16 %v406
      %v411 = vpack.c.b16 %v410, %v409
      %v413 = vshrl.u32 %v411, 16
      %v415 = vrot.slane %v413, 7
      %v416 = vshll.u32 %v411, 16
      %v418 = vor.u32 %v415, %v416
      %v421 = vsel %vm244, 0, %v418
      %v422 = vsel %vm244, %v415, 0
      %v424 = vshrl.u32 %v421, 16
      %v426 = vshll.u32 %v421, 16
      %v428 = vrot.slane %v426, 1
      %v429 = vor.u32 %v424, %v428
      %v431 = vshll.u32 %v422, 16
      %v433 = vrot.slane %v431, 1
      %v434 = vsel %vm247, %v429, %v433
      %v438 = vrot.slane %v421, 1
      %v439 = vrot.slane %v422, 1
      %v440 = vsel %vm264, %v438, %v439
      %v442 = vld [vmem:[%s3] sm:$0xf]
      %v443 = vld [vmem:[%s3 + $0x4] sm:$0xf]
      %v444 = vld [vmem:[%s3 + $0x8] sm:$0xf]
      %v445 = vld [vmem:[%s3 + $0xc] sm:$0xf]
      %v446 = vld [vmem:[%s3 + $0x10] sm:$0xf]
      %v447 = vld [vmem:[%s3 + $0x14] sm:$0xf]
      %v448 = vld [vmem:[%s3 + $0x18] sm:$0xf]
      %v449 = vld [vmem:[%s3 + $0x1c] sm:$0xf]
      %v450 = vld [vmem:[%s3 + $0x20] sm:$0xf]
      %v451 = vld [vmem:[%s3 + $0x24] sm:$0xf]
      %v452 = vld [vmem:[%s3 + $0x28] sm:$0xf]
      %v453 = vld [vmem:[%s3 + $0x2c] sm:$0xf]
      %v454 = vld [vmem:[%s3 + $0x30] sm:$0xf]
      %v455 = vld [vmem:[%s3 + $0x34] sm:$0xf]
      %v456 = vld [vmem:[%s3 + $0x38] sm:$0xf]
      %v457 = vld [vmem:[%s3 + $0x3c] sm:$0xf]
      %v458 = vld [vmem:[%s3 + $0x40] sm:$0xf]
      %v459 = vld [vmem:[%s3 + $0x44] sm:$0xf]
      %v460 = vld [vmem:[%s3 + $0x48] sm:$0xf]
      %v461 = vld [vmem:[%s3 + $0x4c] sm:$0xf]
      %v462 = vld [vmem:[%s3 + $0x50] sm:$0xf]
      %v463 = vld [vmem:[%s3 + $0x54] sm:$0xf]
      %v464 = vld [vmem:[%s3 + $0x58] sm:$0xf]
      %v465 = vld [vmem:[%s3 + $0x5c] sm:$0xf]
      %v466 = vld [vmem:[%s3 + $0x60] sm:$0xf]
      %v467 = vld [vmem:[%s3 + $0x64] sm:$0xf]
      %v468 = vld [vmem:[%s3 + $0x68] sm:$0xf]
      %v469 = vld [vmem:[%s3 + $0x6c] sm:$0xf]
      %v470 = vld [vmem:[%s3 + $0x70] sm:$0xf]
      %v471 = vld [vmem:[%s3 + $0x74] sm:$0xf]
      %v472 = vld [vmem:[%s3 + $0x78] sm:$0xf]
      %v473 = vld [vmem:[%s3 + $0x7c] sm:$0xf]
      %v474 = vld [vmem:[%s3 + $0x80] sm:$0xf]
      %v475 = vld [vmem:[%s3 + $0x84] sm:$0xf]
      %v476 = vld [vmem:[%s3 + $0x88] sm:$0xf]
      %v477 = vld [vmem:[%s3 + $0x8c] sm:$0xf]
      %v478 = vld [vmem:[%s3 + $0x90] sm:$0xf]
      %v479 = vld [vmem:[%s3 + $0x94] sm:$0xf]
      %v480 = vld [vmem:[%s3 + $0x98] sm:$0xf]
      %v481 = vld [vmem:[%s3 + $0x9c] sm:$0xf]
      %v482 = vld [vmem:[%s3 + $0xa0] sm:$0xf]
      %v483 = vld [vmem:[%s3 + $0xa4] sm:$0xf]
      %v484 = vld [vmem:[%s3 + $0xa8] sm:$0xf]
      %v485 = vld [vmem:[%s3 + $0xac] sm:$0xf]
      %v486 = vld [vmem:[%s3 + $0xb0] sm:$0xf]
      %v487 = vld [vmem:[%s3 + $0xb4] sm:$0xf]
      %v488 = vld [vmem:[%s3 + $0xb8] sm:$0xf]
      %v489 = vld [vmem:[%s3 + $0xbc] sm:$0xf]
      %v490 = vld [vmem:[%s4] sm:$0x1]
      %v492 = vperm.slane %v490, 0
      %v542 = vunpack.c.l.b16 %v442
      %v543 = vunpack.c.l.b16 %v443
      %v544 = vunpack.c.l.b16 %v444
      %v545 = vunpack.c.l.b16 %v445
      %v546 = vunpack.c.l.b16 %v446
      %v547 = vunpack.c.l.b16 %v447
      %v548 = vunpack.c.l.b16 %v448
      %v549 = vunpack.c.l.b16 %v449
      %v550 = vunpack.c.l.b16 %v450
      %v551 = vunpack.c.l.b16 %v451
      %v552 = vunpack.c.l.b16 %v452
      %v553 = vunpack.c.l.b16 %v453
      %v554 = vunpack.c.l.b16 %v454
      %v555 = vunpack.c.l.b16 %v455
      %v556 = vunpack.c.l.b16 %v456
      %v557 = vunpack.c.l.b16 %v457
      %v558 = vunpack.c.l.b16 %v458
      %v559 = vunpack.c.l.b16 %v459
      %v560 = vunpack.c.l.b16 %v460
      %v561 = vunpack.c.l.b16 %v461
      %v562 = vunpack.c.l.b16 %v462
      %v563 = vunpack.c.l.b16 %v463
      %v564 = vunpack.c.l.b16 %v464
      %v565 = vunpack.c.l.b16 %v465
      %v566 = vunpack.c.l.b16 %v466
      %v567 = vunpack.c.l.b16 %v467
      %v568 = vunpack.c.l.b16 %v468
      %v569 = vunpack.c.l.b16 %v469
      %v570 = vunpack.c.l.b16 %v470
      %v571 = vunpack.c.l.b16 %v471
      %v572 = vunpack.c.l.b16 %v472
      %v573 = vunpack.c.l.b16 %v473
      %v574 = vunpack.c.l.b16 %v474
      %v575 = vunpack.c.l.b16 %v475
      %v576 = vunpack.c.l.b16 %v476
      %v577 = vunpack.c.l.b16 %v477
      %v578 = vunpack.c.l.b16 %v478
      %v579 = vunpack.c.l.b16 %v479
      %v580 = vunpack.c.l.b16 %v480
      %v581 = vunpack.c.l.b16 %v481
      %v582 = vunpack.c.l.b16 %v482
      %v583 = vunpack.c.l.b16 %v483
      %v584 = vunpack.c.l.b16 %v484
      %v585 = vunpack.c.l.b16 %v485
      %v586 = vunpack.c.l.b16 %v486
      %v587 = vunpack.c.l.b16 %v487
      %v588 = vunpack.c.l.b16 %v488
      %v589 = vunpack.c.l.b16 %v489
      %v590 = vpack.c.b16 %v543, %v542
      %v591 = vpack.c.b16 %v545, %v544
      %v592 = vpack.c.b16 %v547, %v546
      %v593 = vpack.c.b16 %v549, %v548
      %v594 = vpack.c.b16 %v551, %v550
      %v595 = vpack.c.b16 %v553, %v552
      %v596 = vpack.c.b16 %v555, %v554
      %v597 = vpack.c.b16 %v557, %v556
      %v598 = vpack.c.b16 %v559, %v558
      %v599 = vpack.c.b16 %v561, %v560
      %v600 = vpack.c.b16 %v563, %v562
      %v601 = vpack.c.b16 %v565, %v564
      %v602 = vpack.c.b16 %v567, %v566
      %v603 = vpack.c.b16 %v569, %v568
      %v604 = vpack.c.b16 %v571, %v570
      %v605 = vpack.c.b16 %v573, %v572
      %v606 = vpack.c.b16 %v575, %v574
      %v607 = vpack.c.b16 %v577, %v576
      %v608 = vpack.c.b16 %v579, %v578
      %v609 = vpack.c.b16 %v581, %v580
      %v610 = vpack.c.b16 %v583, %v582
      %v611 = vpack.c.b16 %v585, %v584
      %v612 = vpack.c.b16 %v587, %v586
      %v613 = vpack.c.b16 %v589, %v588
      %638 = vmatpush.bf16.msra.mxu0 %v597
      %639 = vmatpush.bf16.msra.mxu0 %v596
      %640 = vmatpush.bf16.msra.mxu0 %v595
      %641 = vmatpush.bf16.msra.mxu0 %v594
      %642 = vmatpush.bf16.msra.mxu0 %v593
      %643 = vmatpush.bf16.msra.mxu0 %v592
      %644 = vmatpush.bf16.msra.mxu0 %v591
      %645 = vmatpush.bf16.msra.mxu0 %v590
      %646 = vmatmul.bf16.gmra.mxu0 %v421
      %v647 = vpop.f32.mrf.mxu0
      %v648 = vadd.f32 %v492, %v647
      %v649 = vpop.f32.mrf.mxu0
      %v650 = vadd.f32 %v492, %v649
      %651 = vdwg.mxu0
      %652 = vmatpush.bf16.msra.mxu0 %v605
      %653 = vmatpush.bf16.msra.mxu0 %v604
      %654 = vmatpush.bf16.msra.mxu0 %v603
      %655 = vmatpush.bf16.msra.mxu0 %v602
      %656 = vmatpush.bf16.msra.mxu0 %v601
      %657 = vmatpush.bf16.msra.mxu0 %v600
      %658 = vmatpush.bf16.msra.mxu0 %v599
      %659 = vmatpush.bf16.msra.mxu0 %v598
      %660 = vmatmul.bf16.gmra.mxu0 %v434
      %v661 = vpop.f32.mrf.mxu0
      %v662 = vadd.f32 %v648, %v661
      %v663 = vpop.f32.mrf.mxu0
      %v664 = vadd.f32 %v650, %v663
      %665 = vdwg.mxu0
      %666 = vmatpush.bf16.msra.mxu0 %v613
      %667 = vmatpush.bf16.msra.mxu0 %v612
      %668 = vmatpush.bf16.msra.mxu0 %v611
      %669 = vmatpush.bf16.msra.mxu0 %v610
      %670 = vmatpush.bf16.msra.mxu0 %v609
      %671 = vmatpush.bf16.msra.mxu0 %v608
      %672 = vmatpush.bf16.msra.mxu0 %v607
      %673 = vmatpush.bf16.msra.mxu0 %v606
      %674 = vmatmul.bf16.gmra.mxu0 %v440
      %v675 = vpop.f32.mrf.mxu0
      %v676 = vadd.f32 %v662, %v675
      %v677 = vpop.f32.mrf.mxu0
      %v678 = vadd.f32 %v664, %v677
      %679 = vdwg.mxu0
      %v680 = vmax.f32 %v676, 0.0
      %v681 = vmax.f32 %v678, 0.0
      %682 = vst [vmem:[%s224] sm:$0xff] %v680
      %683 = vst [vmem:[%s224 + $0x8] sm:$0xff] %v681
      %p684 = scmp.lt.s32.totalorder %s16, 1
      %s685 = scalar_select %p684, %s16, 1
      %s686 = smul.addr %s685, 2
      %s687 = smul.addr %s686, 8
      %s688 = scalar_lea.vmem %s5, %s687
      // Predicated region
      $region41: #{vgg_block_nomax.1} parent=39 // pred_check
        %p689 = pneg %p144
      $region42: #{vgg_block_nomax.1} parent=39 // pred_check_branch
        %691 = sbr.rel (%p689) target = $region44
      $region43: #{vgg_block_nomax.1} parent=39 // pred_region
        _
      $region44: #{vgg_block_nomax.1} parent=39 // pred_fallthru
        _
    $region40: #{vgg_block_nomax.1} parent=5 // pred_fallthru
      _
    %p692 = scmp.le.s32.totalorder 2, %s11
    // Predicated region
    $region45: #{vgg_block_nomax.1} parent=5 // pred_check
      %p693 = pneg %p692
    $region46: #{vgg_block_nomax.1} parent=5 // pred_check_branch
      %695 = sbr.rel (%p693) target = $region48
    $region47: #{vgg_block_nomax.1} parent=5 // pred_region
      %s696 = ssub.s32 %s11, 2
      // Predicated region
      $region49: #{vgg_block_nomax.1} parent=47 // pred_check
        %p697 = pneg %p150
      $region50: #{vgg_block_nomax.1} parent=47 // pred_check_branch
        %699 = sbr.rel (%p697) target = $region52
      $region51: #{vgg_block_nomax.1} parent=47 // pred_region
        %p700 = scmp.lt.s32.totalorder %s17, 1
        %s701 = scalar_select %p700, %s17, 1
        %s702 = smul.addr %s701, 2
        %s703 = smul.addr %s702, 8
        %s704 = scalar_lea.vmem %s5, %s703
      $region52: #{vgg_block_nomax.1} parent=47 // pred_fallthru
        _
    $region48: #{vgg_block_nomax.1} parent=5 // pred_fallthru
      _
  $region6: #{vgg_block_nomax.1} parent=0 // loop_footer
    %s15 = sadd.s32 1, %s11
  $region7: #{vgg_block_nomax.1} parent=0 // loop_footer_branch
    %10 = sbr.rel target = $region3
  $region8: #{vgg_block_nomax.1} parent=0 // loop_exit
    _

</llo_original>
